<compile_context>
chip_gen: v6e
topology: v6e:2x2x1
jax: 0.10.0
libtpu: 0.0.40
codegen_flags: <defaults>
</compile_context>

<pallas_src>
import functools

import jax
import jax.numpy as jnp
from jax.experimental import pallas as pl
from jax.experimental.pallas import tpu as pltpu


# ---------------------------------------------------------------------------
# Kernel
# ---------------------------------------------------------------------------
def _ffn_kernel(x_ref, w1_ref, w3_ref, w2_ref, o_ref, acc_ref, *, compute_dtype):
    # x_ref:  (tm, dim)   original x dtype (cast in-kernel)
    # w1_ref: (dim, tn)   w1^T tile (compute dtype)
    # w3_ref: (dim, tn)   w3^T tile (compute dtype)
    # w2_ref: (tn, dim)   w2^T tile (compute dtype)
    # o_ref:  (tm, dim)   out dtype
    # acc_ref:(tm, dim)   f32 accumulator, resident across the hidden axis
    n = pl.program_id(1)

    @pl.when(n == 0)
    def _():
        acc_ref[...] = jnp.zeros_like(acc_ref)

    x = x_ref[...].astype(compute_dtype)

    # GEMM1 as two dots on the (already separate) weight refs — no h13 slab.
    h1 = jnp.dot(x, w1_ref[...], preferred_element_type=jnp.float32)
    h3 = jnp.dot(x, w3_ref[...], preferred_element_type=jnp.float32)

    # SwiGLU gate in f32 on the per-tile intermediate only (EUP sigmoid).
    g = (h1 * jax.nn.sigmoid(h1)) * h3                      # (tm, tn) f32

    # GEMM2, accumulated in f32 across hidden tiles.
    acc_ref[...] += jnp.dot(g.astype(w2_ref.dtype), w2_ref[...],
                            preferred_element_type=jnp.float32)

    @pl.when(n == pl.num_programs(1) - 1)
    def _():
        o_ref[...] = acc_ref[...].astype(o_ref.dtype)


# ---------------------------------------------------------------------------
# Tiling / budgeting helpers
# ---------------------------------------------------------------------------
def _round_up(x, n):
    return ((x + n - 1) // n) * n


def _sublane_multiple(dtype):
    bits = jnp.dtype(dtype).itemsize * 8
    return max(8, 256 // bits)          # 8 for 32-bit, 16 for bf16, 32 for 8-bit


def _tpu_generation():
    try:
        kind = jax.devices()[0].device_kind.lower()
    except Exception:
        return None
    if "v5 lite" in kind or "v5e" in kind or "v5lite" in kind:
        return "v5e"
    if "v6" in kind:
        return "v6e"
    if "v7" in kind:
        return "v7x"
    return None


def _vmem_capacity_bytes(gen):
    try:
        return int(pltpu.get_tpu_info().vmem_capacity_bytes)
    except Exception:
        mib = {"v5e": 128, "v6e": 128, "v7x": 64}.get(gen, 64)
        return mib * 1024 * 1024


# Roofline-crossing token tiles: FLOP per weight-byte ~ tm must exceed
# peak_TF/s / HBM_TB/s  (~240 v5e, ~680 v6e, ~320 per TC on v7x).
_DEFAULT_TM = {"v5e": 512, "v6e": 768, "v7x": 512}
_DEFAULT_TN = {"v5e": 256, "v6e": 256, "v7x": 256}


def _pick_tn(hidden, tn_cap):
    """Largest hidden tile <= tn_cap (multiple of 128) dividing hidden."""
    if hidden % 128 != 0:
        return hidden            # single hidden block; guarded in the factory
    tn = min(_round_up(tn_cap, 128), hidden)
    tn = max(128, (tn // 128) * 128)
    while hidden % tn != 0:
        tn -= 128
    return tn


# ---------------------------------------------------------------------------
# Module factory (weight prep happens once here, not per forward call)
# ---------------------------------------------------------------------------
def make_feed_forward(w1, w2, w3, *, compute_dtype=jnp.bfloat16, out_dtype=None,
                      tm=None, tn=None, weight_buffers=2, vmem_limit_bytes=None):
    """w1, w3: (hidden, dim); w2: (dim, hidden)  [torch nn.Linear layout].
    Returns forward(x) computing w2(silu(w1(x)) * w3(x))."""
    hidden, dim = w1.shape
    assert w3.shape == (hidden, dim)
    assert w2.shape == (dim, hidden)

    gen = _tpu_generation()
    w_itemsize = jnp.dtype(compute_dtype).itemsize

    if vmem_limit_bytes is None:
        cap = _vmem_capacity_bytes(gen)
        # ~96 MiB on v5e/v6e (128 MiB physical), ~48 MiB on v7x (64 MiB).
        vmem_limit_bytes = min(cap * 3 // 4, 100 * 1024 * 1024)
    vmem_limit_bytes = int(vmem_limit_bytes)

    if tn is None:
        tn = _pick_tn(hidden, _DEFAULT_TN.get(gen, 256))
    assert hidden % tn == 0, "tn must divide hidden"
    n_h = hidden // tn

    # Guard: the weight tiles alone must fit comfortably (e.g. the
    # hidden % 128 != 0 fallback puts all of hidden in one block).
    weight_tile_bytes = weight_buffers * 3 * dim * tn * w_itemsize
    if weight_tile_bytes > vmem_limit_bytes * 3 // 4:
        raise ValueError(
            f"weight tiles ({weight_tile_bytes / 2**20:.1f} MiB) do not fit the "
            f"VMEM budget ({vmem_limit_bytes / 2**20:.1f} MiB); pass a smaller "
            f"tn (hidden={hidden}, dim={dim}).")

    # One-time weight prep: cast + transpose so the kernel does row-major GEMMs.
    w1t = jnp.asarray(w1, compute_dtype).T            # (dim, hidden)
    w3t = jnp.asarray(w3, compute_dtype).T            # (dim, hidden)
    w2t = jnp.asarray(w2, compute_dtype).T            # (hidden, dim)

    tm_want = _DEFAULT_TM.get(gen, 512) if tm is None else tm

    kernel = functools.partial(_ffn_kernel, compute_dtype=compute_dtype)

    wspec_kw = {}
    if weight_buffers > 2:
        # Deeper weight pipelining (use on v6e where VMEM headroom exists).
        wspec_kw = dict(pipeline_mode=pl.Buffered(weight_buffers))

    def forward(x):
        orig_shape = x.shape
        assert orig_shape[-1] == dim
        x2d = x.reshape(-1, dim)
        m = x2d.shape[0]

        o_dtype = jnp.dtype(x.dtype if out_dtype is None else out_dtype)
        x_it = jnp.dtype(x.dtype).itemsize
        o_it = o_dtype.itemsize
        sub = max(_sublane_multiple(x.dtype), _sublane_multiple(o_dtype))

        # --- Fit tm against the full live-buffer VMEM footprint ------------
        # weights: weight_buffers * (w1 + w3 + w2) tiles (fixed above)
        # per token row: 2 x-bufs + 2 out-bufs + f32 acc + f32 h1/h3/g tiles
        per_row = dim * (2 * x_it + 2 * o_it + 4) + 3 * tn * 4
        slack = 2 * 1024 * 1024                       # compiler scratch etc.
        avail = vmem_limit_bytes - weight_tile_bytes - slack
        if avail < sub * per_row:
            raise ValueError("VMEM budget too small for a single token tile; "
                             "reduce tn or raise vmem_limit_bytes.")
        tm_max = (avail // per_row) // sub * sub
        tm_ = min(tm_want, tm_max, _round_up(m, sub))
        tm_ = max(sub, (tm_ // sub) * sub)

        m_pad = pl.cdiv(m, tm_) * tm_
        xk = x2d
        if m_pad != m:
            # Ragged tail only: padded rows give silu(0)*0 = 0, sliced off below.
            xk = jnp.pad(x2d, ((0, m_pad - m), (0, 0)))

        n_token_tiles = m_pad // tm_
        grid = (n_token_tiles, n_h)
        # TODO(synk): decode-shaped m (a single token tile) only streams weights
        # through one TC's HBM path on v7x; split the hidden axis across the two
        # cores (core_map + shared/partial accumulators) or fall back to XLA.

        cost = pl.CostEstimate(
            flops=6 * m_pad * dim * hidden,
            transcendentals=m_pad * hidden,
            # Weights are re-streamed once per token tile.
            bytes_accessed=(n_token_tiles * 3 * dim * hidden * w_itemsize
                            + m_pad * dim * x_it + m_pad * dim * o_it),
        )

        out = pl.pallas_call(
            kernel,
            out_shape=jax.ShapeDtypeStruct((m_pad, dim), o_dtype),
            grid_spec=pltpu.PrefetchScalarGridSpec(
                num_scalar_prefetch=0,
                grid=grid,
                in_specs=[
                    pl.BlockSpec((tm_, dim), lambda i, n: (i, 0)),
                    pl.BlockSpec((dim, tn), lambda i, n: (0, n), **wspec_kw),
                    pl.BlockSpec((dim, tn), lambda i, n: (0, n), **wspec_kw),
                    pl.BlockSpec((tn, dim), lambda i, n: (n, 0), **wspec_kw),
                ],
                out_specs=pl.BlockSpec((tm_, dim), lambda i, n: (i, 0)),
                scratch_shapes=[pltpu.VMEM((tm_, dim), jnp.float32)],
            ),
            compiler_params=pltpu.CompilerParams(
                dimension_semantics=("parallel", "arbitrary"),
                vmem_limit_bytes=vmem_limit_bytes,
            ),
            cost_estimate=cost,
        )(xk, w1t, w3t, w2t)

        if m_pad != m:
            out = out[:m]
        return out.reshape(orig_shape)

    return forward


def llama_hidden_dim(hidden_dim, multiple_of, ffn_dim_multiplier):
    hidden_dim = int(2 * hidden_dim / 3)
    if ffn_dim_multiplier is not None:
        hidden_dim = int(ffn_dim_multiplier * hidden_dim)
    hidden_dim = multiple_of * ((hidden_dim + multiple_of - 1) // multiple_of)
    return hidden_dim


if __name__ == "__main__":
    # Module config (small, consistent with llama FeedForward.__init__)
    dim = 128
    hidden_dim_in = 256
    multiple_of = 128
    ffn_dim_multiplier = None
    hidden = llama_hidden_dim(hidden_dim_in, multiple_of, ffn_dim_multiplier)  # -> 256

    batch, seq = 2, 8

    key = jax.random.PRNGKey(0)
    kx, k1, k2, k3 = jax.random.split(key, 4)

    x = jax.random.normal(kx, (batch, seq, dim), dtype=jnp.float32)
    # torch nn.Linear(in, out, bias=False).weight has shape (out, in)
    w1 = jax.random.normal(k1, (hidden, dim), dtype=jnp.float32) * 0.02
    w2 = jax.random.normal(k2, (dim, hidden), dtype=jnp.float32) * 0.02
    w3 = jax.random.normal(k3, (hidden, dim), dtype=jnp.float32) * 0.02

    # Reference (same math as torch forward), f32.
    h1 = x @ w1.T
    h3 = x @ w3.T
    ref = (h1 * jax.nn.sigmoid(h1) * h3) @ w2.T

    # f32 compute path: tight check against the f32 reference.
    ffn_f32 = make_feed_forward(w1, w2, w3, compute_dtype=jnp.float32)
    out_f32 = ffn_f32(x)
    jax.block_until_ready(out_f32)
    assert out_f32.shape == x.shape
    assert jnp.allclose(out_f32, ref, atol=1e-4, rtol=1e-4), "f32 path mismatch"

    # bf16 compute path (default, MXU-native): looser relative check.
    ffn_bf16 = make_feed_forward(w1, w2, w3)  # compute_dtype=bf16
    out_bf16 = ffn_bf16(x)
    jax.block_until_ready(out_bf16)
    assert out_bf16.shape == x.shape
    rel = jnp.linalg.norm(out_bf16 - ref) / jnp.linalg.norm(ref)
    assert float(rel) < 2e-2, f"bf16 path relative error too large: {float(rel)}"

    print("KERNEL_OK")
</pallas_src>

<mosaic_0001>
module attributes {stable_mosaic.version = 11 : i64} {
  func.func @_ffn_kernel(%arg0: i32, %arg1: i32, %arg2: memref<16x128xf32, #tpu.memory_space<vmem>>, %arg3: memref<128x256xf32, #tpu.memory_space<vmem>>, %arg4: memref<128x256xf32, #tpu.memory_space<vmem>>, %arg5: memref<256x128xf32, #tpu.memory_space<vmem>>, %arg6: memref<16x128xf32, #tpu.memory_space<vmem>>, %arg7: memref<16x128xf32, #tpu.memory_space<vmem>>) attributes {dimension_semantics = [#tpu.dimension_semantics<parallel>, #tpu.dimension_semantics<arbitrary>], iteration_bounds = array<i64: 1, 1>, scalar_prefetch = 0 : i64, scratch_operands = 1 : i64, tpu.core_type = #tpu.core_type<tc>, window_params = [{transform_indices = @transform_0, window_bounds = array<i64: 16, 128>}, {transform_indices = @transform_1, window_bounds = array<i64: 128, 256>}, {transform_indices = @transform_2, window_bounds = array<i64: 128, 256>}, {transform_indices = @transform_3, window_bounds = array<i64: 256, 128>}, {transform_indices = @transform_4, window_bounds = array<i64: 16, 128>}]} {
    %c0_i32 = arith.constant 0 : i32
    %0 = arith.cmpi eq, %arg1, %c0_i32 : i32
    %1 = arith.extui %0 : i1 to i32
    %c0_i32_0 = arith.constant 0 : i32
    %2 = arith.cmpi ne, %1, %c0_i32_0 : i32
    scf.if %2 {
      %cst_17 = arith.constant 0.000000e+00 : f32
      %23 = vector.broadcast %cst_17 : f32 to vector<16x128xf32>
      %c0_18 = arith.constant 0 : index
      %c0_19 = arith.constant 0 : index
      %24 = vector.load %arg7[%c0_18, %c0_19] : memref<16x128xf32, #tpu.memory_space<vmem>>, vector<16x128xf32>
      tpu.vector_store %arg7[%c0_18, %c0_19], %23 {strides = array<i32>} : memref<16x128xf32, #tpu.memory_space<vmem>>, vector<16x128xf32>,
    } else {
    }
    %c0 = arith.constant 0 : index
    %c0_1 = arith.constant 0 : index
    %3 = vector.load %arg2[%c0, %c0_1] : memref<16x128xf32, #tpu.memory_space<vmem>>, vector<16x128xf32>
    %c0_2 = arith.constant 0 : index
    %c0_3 = arith.constant 0 : index
    %4 = vector.load %arg3[%c0_2, %c0_3] : memref<128x256xf32, #tpu.memory_space<vmem>>, vector<128x256xf32>
    %cst = arith.constant dense<0.000000e+00> : vector<16x256xf32>
    %5 = tpu.matmul %3, %4, %cst {dimension_numbers = #tpu.dot_dimension_numbers<[1], [0], [0], [1], [0, 0, 1, 1], [], []>} : vector<16x128xf32>, vector<128x256xf32>, vector<16x256xf32> -> vector<16x256xf32>
    %c0_4 = arith.constant 0 : index
    %c0_5 = arith.constant 0 : index
    %6 = vector.load %arg4[%c0_4, %c0_5] : memref<128x256xf32, #tpu.memory_space<vmem>>, vector<128x256xf32>
    %cst_6 = arith.constant dense<0.000000e+00> : vector<16x256xf32>
    %7 = tpu.matmul %3, %6, %cst_6 {dimension_numbers = #tpu.dot_dimension_numbers<[1], [0], [0], [1], [0, 0, 1, 1], [], []>} : vector<16x128xf32>, vector<128x256xf32>, vector<16x256xf32> -> vector<16x256xf32>
    %8 = arith.negf %5 : vector<16x256xf32>
    %9 = math.exp %8 : vector<16x256xf32>
    %cst_7 = arith.constant 1.000000e+00 : f32
    %10 = vector.broadcast %cst_7 : f32 to vector<16x256xf32>
    %11 = arith.addf %10, %9 : vector<16x256xf32>
    %12 = arith.divf %10, %11 : vector<16x256xf32>
    %13 = arith.mulf %5, %12 : vector<16x256xf32>
    %14 = arith.mulf %13, %7 : vector<16x256xf32>
    %c0_8 = arith.constant 0 : index
    %c0_9 = arith.constant 0 : index
    %15 = vector.load %arg7[%c0_8, %c0_9] : memref<16x128xf32, #tpu.memory_space<vmem>>, vector<16x128xf32>
    %c0_10 = arith.constant 0 : index
    %c0_11 = arith.constant 0 : index
    %16 = vector.load %arg5[%c0_10, %c0_11] : memref<256x128xf32, #tpu.memory_space<vmem>>, vector<256x128xf32>
    %cst_12 = arith.constant dense<0.000000e+00> : vector<16x128xf32>
    %17 = tpu.matmul %14, %16, %cst_12 {dimension_numbers = #tpu.dot_dimension_numbers<[1], [0], [0], [1], [0, 0, 1, 1], [], []>} : vector<16x256xf32>, vector<256x128xf32>, vector<16x128xf32> -> vector<16x128xf32>
    %18 = arith.addf %15, %17 : vector<16x128xf32>
    %c0_13 = arith.constant 0 : index
    %c0_14 = arith.constant 0 : index
    %19 = vector.load %arg7[%c0_13, %c0_14] : memref<16x128xf32, #tpu.memory_space<vmem>>, vector<16x128xf32>
    tpu.vector_store %arg7[%c0_13, %c0_14], %18 {strides = array<i32>} : memref<16x128xf32, #tpu.memory_space<vmem>>, vector<16x128xf32>,
    %c0_i32_15 = arith.constant 0 : i32
    %20 = arith.cmpi eq, %arg1, %c0_i32_15 : i32
    %21 = arith.extui %20 : i1 to i32
    %c0_i32_16 = arith.constant 0 : i32
    %22 = arith.cmpi ne, %21, %c0_i32_16 : i32
    scf.if %22 {
      %c0_17 = arith.constant 0 : index
      %c0_18 = arith.constant 0 : index
      %23 = vector.load %arg7[%c0_17, %c0_18] : memref<16x128xf32, #tpu.memory_space<vmem>>, vector<16x128xf32>
      %c0_19 = arith.constant 0 : index
      %c0_20 = arith.constant 0 : index
      %24 = vector.load %arg6[%c0_19, %c0_20] : memref<16x128xf32, #tpu.memory_space<vmem>>, vector<16x128xf32>
      tpu.vector_store %arg6[%c0_19, %c0_20], %23 {strides = array<i32>} : memref<16x128xf32, #tpu.memory_space<vmem>>, vector<16x128xf32>,
    } else {
    }
    return
  }
  func.func @transform_0(%arg0: i32, %arg1: i32) -> (i32, i32) {
    %c0_i32 = arith.constant 0 : i32
    %c0_i32_0 = arith.constant 0 : i32
    return %arg0, %c0_i32 : i32, i32
  }
  func.func @transform_1(%arg0: i32, %arg1: i32) -> (i32, i32) {
    %c0_i32 = arith.constant 0 : i32
    %c0_i32_0 = arith.constant 0 : i32
    return %c0_i32, %arg1 : i32, i32
  }
  func.func @transform_2(%arg0: i32, %arg1: i32) -> (i32, i32) {
    %c0_i32 = arith.constant 0 : i32
    %c0_i32_0 = arith.constant 0 : i32
    return %c0_i32, %arg1 : i32, i32
  }
  func.func @transform_3(%arg0: i32, %arg1: i32) -> (i32, i32) {
    %c0_i32 = arith.constant 0 : i32
    %c0_i32_0 = arith.constant 0 : i32
    return %arg1, %c0_i32 : i32, i32
  }
  func.func @transform_4(%arg0: i32, %arg1: i32) -> (i32, i32) {
    %c0_i32 = arith.constant 0 : i32
    %c0_i32_0 = arith.constant 0 : i32
    return %arg0, %c0_i32 : i32, i32
  }
}

</mosaic_0001>

<llo_original>
// kernel: tpu_custom_call.1
$region0: #{tpu_custom_call.1}
  #allocation0 [shape = 'u32[]', space=smem, size = 0x4, offset = 0x4, fixed_abs, tag = 'smem constant byte address 0x4 - core index']
  #allocation1 [shape = 'u32[144,128]{1,0:T(1,128)}', space=vmem, size = 0x12000, scoped, tag = 'internal scratch']
  #allocation2 [shape = 'f32[16,128]{1,0:T(8,128)}', space=vmem, size = 0x2000, scoped, tag = 'scratch operand']
  %s0 = inlined_call_operand.hbm [shape: f32[16,128], index: 0, kind: input, shape index: {}]
  %s1 = inlined_call_operand.hbm [shape: f32[128,256], index: 1, kind: input, shape index: {}]
  %s2 = inlined_call_operand.hbm [shape: f32[128,256], index: 2, kind: input, shape index: {}]
  %s3 = inlined_call_operand.hbm [shape: f32[256,128], index: 3, kind: input, shape index: {}]
  %s4 = inlined_call_operand.hbm [shape: f32[16,128], index: 4, kind: output, shape index: {}]
  %s5 = sld [smem:[#allocation0]]
  $region50: #{tpu_custom_call.1} parent=0
    _
  %s7 = ssub.s32 1, %s5
  %s8 = scalar_select 0, %s7, %s5
  $region1: #{tpu_custom_call.1} parent=0
    #allocation3 [shape = 'u8[8192]{0}', space=vmem, size = 0x2000, scoped, tag = 'input window, operand 0, single buffered']
    #allocation4 [shape = 's32[1]{0}', space=sflag, size = 0x4, scoped, tag = 'scoped memory for tpu_custom_call.1']
    #allocation5 [shape = 's32[1]{0}', space=sflag, size = 0x4, scoped, tag = 'scoped memory for tpu_custom_call.1']
    #allocation6 [shape = 'u8[131072]{0}', space=vmem, size = 0x20000, scoped, tag = 'input window, operand 1, single buffered']
    #allocation7 [shape = 's32[1]{0}', space=sflag, size = 0x4, scoped, tag = 'scoped memory for tpu_custom_call.1']
    #allocation8 [shape = 'u8[131072]{0}', space=vmem, size = 0x20000, scoped, tag = 'input window, operand 2, single buffered']
    #allocation9 [shape = 'u8[131072]{0}', space=vmem, size = 0x20000, scoped, tag = 'input window, operand 3, single buffered']
    #allocation10 [shape = 's32[1]{0}', space=sflag, size = 0x4, scoped, tag = 'scoped memory for tpu_custom_call.1']
    #allocation11 [shape = 'u8[8192]{0}', space=vmem, size = 0x2000, scoped, tag = 'output window, operand 0, single buffered']
    %9 = vsyncpa [#allocation4], 0
    %10 = vsyncpa [#allocation7], 0
    %11 = vsyncpa [#allocation10], 0
    %12 = vsyncpa [#allocation5], 0
    // Predicated region
    $region2: #{tpu_custom_call.1} parent=1 // pred_check
      _
    $region3: #{tpu_custom_call.1} parent=1 // pred_check_branch
      %14 = sbr.rel (0) target = $region5
    $region4: #{tpu_custom_call.1} parent=1 // pred_region
      %s16 = ssub.s32 256, 256
      %17 = vsyncadd [#allocation4], %s16
      %s18 = sshll.u32 [#allocation3], 4
      %s19 = int_to_ptr.vmem [resolvable:$true] %s18
      %24 = dma.hbm_to_vmem [thread:$0]  %s0, 256, %s19, [#allocation4], 128, 128, 8
    $region5: #{tpu_custom_call.1} parent=1 // pred_fallthru
      _
    // Predicated region
    $region6: #{tpu_custom_call.1} parent=1 // pred_check
      _
    $region7: #{tpu_custom_call.1} parent=1 // pred_check_branch
      %26 = sbr.rel (0) target = $region9
    $region8: #{tpu_custom_call.1} parent=1 // pred_region
      %s28 = ssub.s32 4096, 4096
      %29 = vsyncadd [#allocation7], %s28
      %s30 = sshll.u32 [#allocation6], 4
      %s31 = int_to_ptr.vmem [resolvable:$true] %s30
      %36 = dma.hbm_to_vmem [thread:$0]  %s1, 4096, %s31, [#allocation7], 256, 256, 16
    $region9: #{tpu_custom_call.1} parent=1 // pred_fallthru
      _
    // Predicated region
    $region10: #{tpu_custom_call.1} parent=1 // pred_check
      _
    $region11: #{tpu_custom_call.1} parent=1 // pred_check_branch
      %38 = sbr.rel (0) target = $region13
    $region12: #{tpu_custom_call.1} parent=1 // pred_region
      %s40 = ssub.s32 4096, 4096
      %41 = vsyncadd [#allocation7], %s40
      %s42 = sshll.u32 [#allocation8], 4
      %s43 = int_to_ptr.vmem [resolvable:$true] %s42
      %48 = dma.hbm_to_vmem [thread:$0]  %s2, 4096, %s43, [#allocation7], 256, 256, 16
    $region13: #{tpu_custom_call.1} parent=1 // pred_fallthru
      _
    // Predicated region
    $region14: #{tpu_custom_call.1} parent=1 // pred_check
      _
    $region15: #{tpu_custom_call.1} parent=1 // pred_check_branch
      %50 = sbr.rel (0) target = $region17
    $region16: #{tpu_custom_call.1} parent=1 // pred_region
      %s52 = ssub.s32 4096, 4096
      %53 = vsyncadd [#allocation10], %s52
      %s54 = sshll.u32 [#allocation9], 4
      %s55 = int_to_ptr.vmem [resolvable:$true] %s54
      %60 = dma.hbm_to_vmem [thread:$0]  %s3, 4096, %s55, [#allocation10], 128, 128, 8
    $region17: #{tpu_custom_call.1} parent=1 // pred_fallthru
      _
    // Predicated region
    $region18: #{tpu_custom_call.1} parent=1 // pred_check
      _
    $region19: #{tpu_custom_call.1} parent=1 // pred_check_branch
      %62 = sbr.rel (0) target = $region21
    $region20: #{tpu_custom_call.1} parent=1 // pred_region
      %63 = dma.done [#allocation4], 256
    $region21: #{tpu_custom_call.1} parent=1 // pred_fallthru
      _
    // Predicated region
    $region22: #{tpu_custom_call.1} parent=1 // pred_check
      _
    $region23: #{tpu_custom_call.1} parent=1 // pred_check_branch
      %65 = sbr.rel (0) target = $region25
    $region24: #{tpu_custom_call.1} parent=1 // pred_region
      %66 = dma.done [#allocation7], 4096
    $region25: #{tpu_custom_call.1} parent=1 // pred_fallthru
      _
    // Predicated region
    $region26: #{tpu_custom_call.1} parent=1 // pred_check
      _
    $region27: #{tpu_custom_call.1} parent=1 // pred_check_branch
      %68 = sbr.rel (0) target = $region29
    $region28: #{tpu_custom_call.1} parent=1 // pred_region
      %69 = dma.done [#allocation7], 4096
    $region29: #{tpu_custom_call.1} parent=1 // pred_fallthru
      _
    // Predicated region
    $region30: #{tpu_custom_call.1} parent=1 // pred_check
      _
    $region31: #{tpu_custom_call.1} parent=1 // pred_check_branch
      %71 = sbr.rel (0) target = $region33
    $region32: #{tpu_custom_call.1} parent=1 // pred_region
      %72 = dma.done [#allocation10], 4096
    $region33: #{tpu_custom_call.1} parent=1 // pred_fallthru
      _
    %p73 = scmp.eq.s32.totalorder 0, 0
    // Predicated region
    $region34: #{tpu_custom_call.1} parent=1 // pred_check
      %p74 = pneg %p73
    $region35: #{tpu_custom_call.1} parent=1 // pred_check_branch
      %76 = sbr.rel (%p74) target = $region37
    $region36: #{tpu_custom_call.1} parent=1 // pred_region
      %77 = vst [vmem:[#allocation2] sm:$0xff] 0.0
      %78 = vst [vmem:[#allocation2 + $0x8] sm:$0xff] 0.0
    $region37: #{tpu_custom_call.1} parent=1 // pred_fallthru
      _
    %v79 = vld [vmem:[#allocation3] sm:$0xff]
    %v80 = vld [vmem:[#allocation3 + $0x8] sm:$0xff]
    %v81 = vld [vmem:[#allocation6] sm:$0xff]
    %v82 = vld [vmem:[#allocation6 + $0x8] sm:$0xff]
    %v83 = vld [vmem:[#allocation6 + $0x10] sm:$0xff]
    %v84 = vld [vmem:[#allocation6 + $0x18] sm:$0xff]
    %v85 = vld [vmem:[#allocation6 + $0x20] sm:$0xff]
    %v86 = vld [vmem:[#allocation6 + $0x28] sm:$0xff]
    %v87 = vld [vmem:[#allocation6 + $0x30] sm:$0xff]
    %v88 = vld [vmem:[#allocation6 + $0x38] sm:$0xff]
    %v89 = vld [vmem:[#allocation6 + $0x40] sm:$0xff]
    %v90 = vld [vmem:[#allocation6 + $0x48] sm:$0xff]
    %v91 = vld [vmem:[#allocation6 + $0x50] sm:$0xff]
    %v92 = vld [vmem:[#allocation6 + $0x58] sm:$0xff]
    %v93 = vld [vmem:[#allocation6 + $0x60] sm:$0xff]
    %v94 = vld [vmem:[#allocation6 + $0x68] sm:$0xff]
    %v95 = vld [vmem:[#allocation6 + $0x70] sm:$0xff]
    %v96 = vld [vmem:[#allocation6 + $0x78] sm:$0xff]
    %v97 = vld [vmem:[#allocation6 + $0x80] sm:$0xff]
    %v98 = vld [vmem:[#allocation6 + $0x88] sm:$0xff]
    %v99 = vld [vmem:[#allocation6 + $0x90] sm:$0xff]
    %v100 = vld [vmem:[#allocation6 + $0x98] sm:$0xff]
    %v101 = vld [vmem:[#allocation6 + $0xa0] sm:$0xff]
    %v102 = vld [vmem:[#allocation6 + $0xa8] sm:$0xff]
    %v103 = vld [vmem:[#allocation6 + $0xb0] sm:$0xff]
    %v104 = vld [vmem:[#allocation6 + $0xb8] sm:$0xff]
    %v105 = vld [vmem:[#allocation6 + $0xc0] sm:$0xff]
    %v106 = vld [vmem:[#allocation6 + $0xc8] sm:$0xff]
    %v107 = vld [vmem:[#allocation6 + $0xd0] sm:$0xff]
    %v108 = vld [vmem:[#allocation6 + $0xd8] sm:$0xff]
    %v109 = vld [vmem:[#allocation6 + $0xe0] sm:$0xff]
    %v110 = vld [vmem:[#allocation6 + $0xe8] sm:$0xff]
    %v111 = vld [vmem:[#allocation6 + $0xf0] sm:$0xff]
    %v112 = vld [vmem:[#allocation6 + $0xf8] sm:$0xff]
    %113 = vmatprep.subr.mxu0 %v112
    %114 = vmatpush1.msra.mxu0 %v111
    %115 = vmatprep.subr.mxu0 %v110
    %116 = vmatpush1.msra.mxu0 %v109
    %117 = vmatprep.subr.mxu0 %v108
    %118 = vmatpush1.msra.mxu0 %v107
    %119 = vmatprep.subr.mxu0 %v106
    %120 = vmatpush1.msra.mxu0 %v105
    %121 = vmatprep.subr.mxu0 %v104
    %122 = vmatpush1.msra.mxu0 %v103
    %123 = vmatprep.subr.mxu0 %v102
    %124 = vmatpush1.msra.mxu0 %v101
    %125 = vmatprep.subr.mxu0 %v100
    %126 = vmatpush1.msra.mxu0 %v99
    %127 = vmatprep.subr.mxu0 %v98
    %128 = vmatpush1.msra.mxu0 %v97
    %129 = vmatprep.subr.mxu0 %v96
    %130 = vmatpush1.msra.mxu0 %v95
    %131 = vmatprep.subr.mxu0 %v94
    %132 = vmatpush1.msra.mxu0 %v93
    %133 = vmatprep.subr.mxu0 %v92
    %134 = vmatpush1.msra.mxu0 %v91
    %135 = vmatprep.subr.mxu0 %v90
    %136 = vmatpush1.msra.mxu0 %v89
    %137 = vmatprep.subr.mxu0 %v88
    %138 = vmatpush1.msra.mxu0 %v87
    %139 = vmatprep.subr.mxu0 %v86
    %140 = vmatpush1.msra.mxu0 %v85
    %141 = vmatprep.subr.mxu0 %v84
    %142 = vmatpush1.msra.mxu0 %v83
    %143 = vmatprep.subr.mxu0 %v82
    %144 = vmatpush1.msra.mxu0 %v81
    %145 = vmatprep.subr.mxu0 0.0
    %146 = vmatpush2.msra.mxu0 0.0
    %147 = vmatprep.subr.mxu0 0.0
    %148 = vmatpush2.msra.mxu0 0.0
    %149 = vmatprep.subr.mxu0 0.0
    %150 = vmatpush2.msra.mxu0 0.0
    %151 = vmatprep.subr.mxu0 0.0
    %152 = vmatpush2.msra.mxu0 0.0
    %153 = vmatprep.subr.mxu0 0.0
    %154 = vmatpush2.msra.mxu0 0.0
    %155 = vmatprep.subr.mxu0 0.0
    %156 = vmatpush2.msra.mxu0 0.0
    %157 = vmatprep.subr.mxu0 0.0
    %158 = vmatpush2.msra.mxu0 0.0
    %159 = vmatprep.subr.mxu0 0.0
    %160 = vmatpush2.msra.mxu0 0.0
    %161 = vmatprep.subr.mxu0 0.0
    %162 = vmatpush2.msra.mxu0 0.0
    %163 = vmatprep.subr.mxu0 0.0
    %164 = vmatpush2.msra.mxu0 0.0
    %165 = vmatprep.subr.mxu0 0.0
    %166 = vmatpush2.msra.mxu0 0.0
    %167 = vmatprep.subr.mxu0 0.0
    %168 = vmatpush2.msra.mxu0 0.0
    %169 = vmatprep.subr.mxu0 0.0
    %170 = vmatpush2.msra.mxu0 0.0
    %171 = vmatprep.subr.mxu0 0.0
    %172 = vmatpush2.msra.mxu0 0.0
    %173 = vmatprep.subr.mxu0 0.0
    %174 = vmatpush2.msra.mxu0 0.0
    %175 = vmatprep.subr.mxu0 0.0
    %176 = vmatpush2.msra.mxu0 0.0
    %177 = vmatprep.mubr.f32.mxu0 0.0
    %178 = vmatmul.mubr.f32.gmra.mxu0 %v79
    %v179 = vpop.f32.mrf.mxu0
    %v180 = vadd.f32 0.0, %v179
    %v181 = vpop.f32.mrf.mxu0
    %v182 = vadd.f32 0.0, %v181
    %183 = vmatprep.mubr.f32.mxu0 0.0
    %184 = vmatmul.mubr.f32.gmra.mxu0 %v80
    %v185 = vpop.f32.mrf.mxu0
    %v186 = vadd.f32 0.0, %v185
    %v187 = vpop.f32.mrf.mxu0
    %v188 = vadd.f32 0.0, %v187
    %189 = vdwg.mxu0
    %v190 = vld [vmem:[#allocation8] sm:$0xff]
    %v191 = vld [vmem:[#allocation8 + $0x8] sm:$0xff]
    %v192 = vld [vmem:[#allocation8 + $0x10] sm:$0xff]
    %v193 = vld [vmem:[#allocation8 + $0x18] sm:$0xff]
    %v194 = vld [vmem:[#allocation8 + $0x20] sm:$0xff]
    %v195 = vld [vmem:[#allocation8 + $0x28] sm:$0xff]
    %v196 = vld [vmem:[#allocation8 + $0x30] sm:$0xff]
    %v197 = vld [vmem:[#allocation8 + $0x38] sm:$0xff]
    %v198 = vld [vmem:[#allocation8 + $0x40] sm:$0xff]
    %v199 = vld [vmem:[#allocation8 + $0x48] sm:$0xff]
    %v200 = vld [vmem:[#allocation8 + $0x50] sm:$0xff]
    %v201 = vld [vmem:[#allocation8 + $0x58] sm:$0xff]
    %v202 = vld [vmem:[#allocation8 + $0x60] sm:$0xff]
    %v203 = vld [vmem:[#allocation8 + $0x68] sm:$0xff]
    %v204 = vld [vmem:[#allocation8 + $0x70] sm:$0xff]
    %v205 = vld [vmem:[#allocation8 + $0x78] sm:$0xff]
    %v206 = vld [vmem:[#allocation8 + $0x80] sm:$0xff]
    %v207 = vld [vmem:[#allocation8 + $0x88] sm:$0xff]
    %v208 = vld [vmem:[#allocation8 + $0x90] sm:$0xff]
    %v209 = vld [vmem:[#allocation8 + $0x98] sm:$0xff]
    %v210 = vld [vmem:[#allocation8 + $0xa0] sm:$0xff]
    %v211 = vld [vmem:[#allocation8 + $0xa8] sm:$0xff]
    %v212 = vld [vmem:[#allocation8 + $0xb0] sm:$0xff]
    %v213 = vld [vmem:[#allocation8 + $0xb8] sm:$0xff]
    %v214 = vld [vmem:[#allocation8 + $0xc0] sm:$0xff]
    %v215 = vld [vmem:[#allocation8 + $0xc8] sm:$0xff]
    %v216 = vld [vmem:[#allocation8 + $0xd0] sm:$0xff]
    %v217 = vld [vmem:[#allocation8 + $0xd8] sm:$0xff]
    %v218 = vld [vmem:[#allocation8 + $0xe0] sm:$0xff]
    %v219 = vld [vmem:[#allocation8 + $0xe8] sm:$0xff]
    %v220 = vld [vmem:[#allocation8 + $0xf0] sm:$0xff]
    %v221 = vld [vmem:[#allocation8 + $0xf8] sm:$0xff]
    %222 = vmatprep.subr.mxu0 %v221
    %223 = vmatpush1.msra.mxu0 %v220
    %224 = vmatprep.subr.mxu0 %v219
    %225 = vmatpush1.msra.mxu0 %v218
    %226 = vmatprep.subr.mxu0 %v217
    %227 = vmatpush1.msra.mxu0 %v216
    %228 = vmatprep.subr.mxu0 %v215
    %229 = vmatpush1.msra.mxu0 %v214
    %230 = vmatprep.subr.mxu0 %v213
    %231 = vmatpush1.msra.mxu0 %v212
    %232 = vmatprep.subr.mxu0 %v211
    %233 = vmatpush1.msra.mxu0 %v210
    %234 = vmatprep.subr.mxu0 %v209
    %235 = vmatpush1.msra.mxu0 %v208
    %236 = vmatprep.subr.mxu0 %v207
    %237 = vmatpush1.msra.mxu0 %v206
    %238 = vmatprep.subr.mxu0 %v205
    %239 = vmatpush1.msra.mxu0 %v204
    %240 = vmatprep.subr.mxu0 %v203
    %241 = vmatpush1.msra.mxu0 %v202
    %242 = vmatprep.subr.mxu0 %v201
    %243 = vmatpush1.msra.mxu0 %v200
    %244 = vmatprep.subr.mxu0 %v199
    %245 = vmatpush1.msra.mxu0 %v198
    %246 = vmatprep.subr.mxu0 %v197
    %247 = vmatpush1.msra.mxu0 %v196
    %248 = vmatprep.subr.mxu0 %v195
    %249 = vmatpush1.msra.mxu0 %v194
    %250 = vmatprep.subr.mxu0 %v193
    %251 = vmatpush1.msra.mxu0 %v192
    %252 = vmatprep.subr.mxu0 %v191
    %253 = vmatpush1.msra.mxu0 %v190
    %254 = vmatprep.subr.mxu0 0.0
    %255 = vmatpush2.msra.mxu0 0.0
    %256 = vmatprep.subr.mxu0 0.0
    %257 = vmatpush2.msra.mxu0 0.0
    %258 = vmatprep.subr.mxu0 0.0
    %259 = vmatpush2.msra.mxu0 0.0
    %260 = vmatprep.subr.mxu0 0.0
    %261 = vmatpush2.msra.mxu0 0.0
    %262 = vmatprep.subr.mxu0 0.0
    %263 = vmatpush2.msra.mxu0 0.0
    %264 = vmatprep.subr.mxu0 0.0
    %265 = vmatpush2.msra.mxu0 0.0
    %266 = vmatprep.subr.mxu0 0.0
    %267 = vmatpush2.msra.mxu0 0.0
    %268 = vmatprep.subr.mxu0 0.0
    %269 = vmatpush2.msra.mxu0 0.0
    %270 = vmatprep.subr.mxu0 0.0
    %271 = vmatpush2.msra.mxu0 0.0
    %272 = vmatprep.subr.mxu0 0.0
    %273 = vmatpush2.msra.mxu0 0.0
    %274 = vmatprep.subr.mxu0 0.0
    %275 = vmatpush2.msra.mxu0 0.0
    %276 = vmatprep.subr.mxu0 0.0
    %277 = vmatpush2.msra.mxu0 0.0
    %278 = vmatprep.subr.mxu0 0.0
    %279 = vmatpush2.msra.mxu0 0.0
    %280 = vmatprep.subr.mxu0 0.0
    %281 = vmatpush2.msra.mxu0 0.0
    %282 = vmatprep.subr.mxu0 0.0
    %283 = vmatpush2.msra.mxu0 0.0
    %284 = vmatprep.subr.mxu0 0.0
    %285 = vmatpush2.msra.mxu0 0.0
    %286 = vmatprep.mubr.f32.mxu0 0.0
    %287 = vmatmul.mubr.f32.gmra.mxu0 %v79
    %v288 = vpop.f32.mrf.mxu0
    %v289 = vadd.f32 0.0, %v288
    %v290 = vpop.f32.mrf.mxu0
    %v291 = vadd.f32 0.0, %v290
    %292 = vmatprep.mubr.f32.mxu0 0.0
    %293 = vmatmul.mubr.f32.gmra.mxu0 %v80
    %v294 = vpop.f32.mrf.mxu0
    %v295 = vadd.f32 0.0, %v294
    %v296 = vpop.f32.mrf.mxu0
    %v297 = vadd.f32 0.0, %v296
    %298 = vdwg.mxu0
    %v299 = vxor.u32 %v180, 2147483648
    %v300 = vxor.u32 %v182, 2147483648
    %v301 = vxor.u32 %v186, 2147483648
    %v302 = vxor.u32 %v188, 2147483648
    %v303 = vmul.f32 %v299, 1.442695
    %v304 = vpow.pop %v303
    %v305 = vmul.f32 %v300, 1.442695
    %v306 = vpow.pop %v305
    %v307 = vmul.f32 %v301, 1.442695
    %v308 = vpow.pop %v307
    %v309 = vmul.f32 %v302, 1.442695
    %v310 = vpow.pop %v309
    %v311 = vadd.f32 %v304, 1.0
    %v312 = vadd.f32 %v306, 1.0
    %v313 = vadd.f32 %v308, 1.0
    %v314 = vadd.f32 %v310, 1.0
    %v315 = vrcp.pop %v311
    %v316 = vmul.f32 1.0, %v315
    %v317 = vrcp.pop %v312
    %v318 = vmul.f32 1.0, %v317
    %v319 = vrcp.pop %v313
    %v320 = vmul.f32 1.0, %v319
    %v321 = vrcp.pop %v314
    %v322 = vmul.f32 1.0, %v321
    %v323 = vmul.f32 %v180, %v316
    %v324 = vmul.f32 %v182, %v318
    %v325 = vmul.f32 %v186, %v320
    %v326 = vmul.f32 %v188, %v322
    %v327 = vmul.f32 %v323, %v289
    %v328 = vmul.f32 %v324, %v291
    %v329 = vmul.f32 %v325, %v295
    %v330 = vmul.f32 %v326, %v297
    %v331 = vld [vmem:[#allocation2] sm:$0xff]
    %v332 = vld [vmem:[#allocation2 + $0x8] sm:$0xff]
    %v333 = vld [vmem:[#allocation9] sm:$0xff]
    %v334 = vld [vmem:[#allocation9 + $0x8] sm:$0xff]
    %v335 = vld [vmem:[#allocation9 + $0x10] sm:$0xff]
    %v336 = vld [vmem:[#allocation9 + $0x18] sm:$0xff]
    %v337 = vld [vmem:[#allocation9 + $0x20] sm:$0xff]
    %v338 = vld [vmem:[#allocation9 + $0x28] sm:$0xff]
    %v339 = vld [vmem:[#allocation9 + $0x30] sm:$0xff]
    %v340 = vld [vmem:[#allocation9 + $0x38] sm:$0xff]
    %v341 = vld [vmem:[#allocation9 + $0x40] sm:$0xff]
    %v342 = vld [vmem:[#allocation9 + $0x48] sm:$0xff]
    %v343 = vld [vmem:[#allocation9 + $0x50] sm:$0xff]
    %v344 = vld [vmem:[#allocation9 + $0x58] sm:$0xff]
    %v345 = vld [vmem:[#allocation9 + $0x60] sm:$0xff]
    %v346 = vld [vmem:[#allocation9 + $0x68] sm:$0xff]
    %v347 = vld [vmem:[#allocation9 + $0x70] sm:$0xff]
    %v348 = vld [vmem:[#allocation9 + $0x78] sm:$0xff]
    %v349 = vld [vmem:[#allocation9 + $0x80] sm:$0xff]
    %v350 = vld [vmem:[#allocation9 + $0x88] sm:$0xff]
    %v351 = vld [vmem:[#allocation9 + $0x90] sm:$0xff]
    %v352 = vld [vmem:[#allocation9 + $0x98] sm:$0xff]
    %v353 = vld [vmem:[#allocation9 + $0xa0] sm:$0xff]
    %v354 = vld [vmem:[#allocation9 + $0xa8] sm:$0xff]
    %v355 = vld [vmem:[#allocation9 + $0xb0] sm:$0xff]
    %v356 = vld [vmem:[#allocation9 + $0xb8] sm:$0xff]
    %v357 = vld [vmem:[#allocation9 + $0xc0] sm:$0xff]
    %v358 = vld [vmem:[#allocation9 + $0xc8] sm:$0xff]
    %v359 = vld [vmem:[#allocation9 + $0xd0] sm:$0xff]
    %v360 = vld [vmem:[#allocation9 + $0xd8] sm:$0xff]
    %v361 = vld [vmem:[#allocation9 + $0xe0] sm:$0xff]
    %v362 = vld [vmem:[#allocation9 + $0xe8] sm:$0xff]
    %v363 = vld [vmem:[#allocation9 + $0xf0] sm:$0xff]
    %v364 = vld [vmem:[#allocation9 + $0xf8] sm:$0xff]
    %365 = vmatprep.subr.mxu0 0.0
    %366 = vmatpush1.msra.mxu0 %v348
    %367 = vmatprep.subr.mxu0 0.0
    %368 = vmatpush1.msra.mxu0 %v347
    %369 = vmatprep.subr.mxu0 0.0
    %370 = vmatpush1.msra.mxu0 %v346
    %371 = vmatprep.subr.mxu0 0.0
    %372 = vmatpush1.msra.mxu0 %v345
    %373 = vmatprep.subr.mxu0 0.0
    %374 = vmatpush1.msra.mxu0 %v344
    %375 = vmatprep.subr.mxu0 0.0
    %376 = vmatpush1.msra.mxu0 %v343
    %377 = vmatprep.subr.mxu0 0.0
    %378 = vmatpush1.msra.mxu0 %v342
    %379 = vmatprep.subr.mxu0 0.0
    %380 = vmatpush1.msra.mxu0 %v341
    %381 = vmatprep.subr.mxu0 0.0
    %382 = vmatpush1.msra.mxu0 %v340
    %383 = vmatprep.subr.mxu0 0.0
    %384 = vmatpush1.msra.mxu0 %v339
    %385 = vmatprep.subr.mxu0 0.0
    %386 = vmatpush1.msra.mxu0 %v338
    %387 = vmatprep.subr.mxu0 0.0
    %388 = vmatpush1.msra.mxu0 %v337
    %389 = vmatprep.subr.mxu0 0.0
    %390 = vmatpush1.msra.mxu0 %v336
    %391 = vmatprep.subr.mxu0 0.0
    %392 = vmatpush1.msra.mxu0 %v335
    %393 = vmatprep.subr.mxu0 0.0
    %394 = vmatpush1.msra.mxu0 %v334
    %395 = vmatprep.subr.mxu0 0.0
    %396 = vmatpush1.msra.mxu0 %v333
    %397 = vmatprep.subr.mxu0 0.0
    %398 = vmatpush2.msra.mxu0 %v364
    %399 = vmatprep.subr.mxu0 0.0
    %400 = vmatpush2.msra.mxu0 %v363
    %401 = vmatprep.subr.mxu0 0.0
    %402 = vmatpush2.msra.mxu0 %v362
    %403 = vmatprep.subr.mxu0 0.0
    %404 = vmatpush2.msra.mxu0 %v361
    %405 = vmatprep.subr.mxu0 0.0
    %406 = vmatpush2.msra.mxu0 %v360
    %407 = vmatprep.subr.mxu0 0.0
    %408 = vmatpush2.msra.mxu0 %v359
    %409 = vmatprep.subr.mxu0 0.0
    %410 = vmatpush2.msra.mxu0 %v358
    %411 = vmatprep.subr.mxu0 0.0
    %412 = vmatpush2.msra.mxu0 %v357
    %413 = vmatprep.subr.mxu0 0.0
    %414 = vmatpush2.msra.mxu0 %v356
    %415 = vmatprep.subr.mxu0 0.0
    %416 = vmatpush2.msra.mxu0 %v355
    %417 = vmatprep.subr.mxu0 0.0
    %418 = vmatpush2.msra.mxu0 %v354
    %419 = vmatprep.subr.mxu0 0.0
    %420 = vmatpush2.msra.mxu0 %v353
    %421 = vmatprep.subr.mxu0 0.0
    %422 = vmatpush2.msra.mxu0 %v352
    %423 = vmatprep.subr.mxu0 0.0
    %424 = vmatpush2.msra.mxu0 %v351
    %425 = vmatprep.subr.mxu0 0.0
    %426 = vmatpush2.msra.mxu0 %v350
    %427 = vmatprep.subr.mxu0 0.0
    %428 = vmatpush2.msra.mxu0 %v349
    %429 = vmatprep.mubr.f32.mxu0 %v328
    %430 = vmatmul.mubr.f32.gmra.mxu0 %v327
    %v431 = vpop.f32.mrf.mxu0
    %v432 = vadd.f32 0.0, %v431
    %v433 = vpop.f32.mrf.mxu0
    %434 = vmatprep.mubr.f32.mxu0 %v330
    %435 = vmatmul.mubr.f32.gmra.mxu0 %v329
    %v436 = vpop.f32.mrf.mxu0
    %v437 = vadd.f32 0.0, %v436
    %v438 = vpop.f32.mrf.mxu0
    %439 = vdwg.mxu0
    %v440 = vadd.f32 %v331, %v432
    %v441 = vadd.f32 %v332, %v437
    %442 = vst [vmem:[#allocation2] sm:$0xff] %v440
    %443 = vst [vmem:[#allocation2 + $0x8] sm:$0xff] %v441
    // Predicated region
    $region38: #{tpu_custom_call.1} parent=1 // pred_check
      %p444 = pneg %p73
    $region39: #{tpu_custom_call.1} parent=1 // pred_check_branch
      %446 = sbr.rel (%p444) target = $region41
    $region40: #{tpu_custom_call.1} parent=1 // pred_region
      %v447 = vld [vmem:[#allocation2] sm:$0xff]
      %v448 = vld [vmem:[#allocation2 + $0x8] sm:$0xff]
      %449 = vst [vmem:[#allocation11] sm:$0xff] %v447
      %450 = vst [vmem:[#allocation11 + $0x8] sm:$0xff] %v448
    $region41: #{tpu_custom_call.1} parent=1 // pred_fallthru
      _
    // Predicated region
    $region42: #{tpu_custom_call.1} parent=1 // pred_check
      _
    $region43: #{tpu_custom_call.1} parent=1 // pred_check_branch
      %452 = sbr.rel (0) target = $region45
    $region44: #{tpu_custom_call.1} parent=1 // pred_region
      %s454 = ssub.s32 256, 256
      %455 = vsyncadd [#allocation5], %s454
      %s456 = sshll.u32 [#allocation11], 4
      %s457 = int_to_ptr.vmem [resolvable:$true] %s456
      %462 = dma.vmem_to_hbm [thread:$0]  %s457, 256, %s4, [#allocation5], 128, 128, 8
    $region45: #{tpu_custom_call.1} parent=1 // pred_fallthru
      _
    // Predicated region
    $region46: #{tpu_custom_call.1} parent=1 // pred_check
      _
    $region47: #{tpu_custom_call.1} parent=1 // pred_check_branch
      %464 = sbr.rel (0) target = $region49
    $region48: #{tpu_custom_call.1} parent=1 // pred_region
      %465 = dma.done [#allocation5], 256
    $region49: #{tpu_custom_call.1} parent=1 // pred_fallthru
      _
    %466 = vsyncpa [#allocation4], 1
    %467 = vsyncpa [#allocation7], 1
    %468 = vsyncpa [#allocation10], 1
    %469 = vsyncpa [#allocation5], 1

</llo_original>
